<compile_context>
chip_gen: v6e
topology: v6e:2x2x1
jax: 0.10.0
libtpu: 0.0.40
codegen_flags: <defaults>
</compile_context>

<pallas_src>
import functools

import jax
import jax.numpy as jnp
from jax import lax
from jax.experimental import pallas as pl
from jax.experimental.pallas import tpu as pltpu


IN_DIM = 120 + 24          # 144
DIMS = (IN_DIM, 64, 32, 16, 8)


def _round_up(n, m):
    return ((n + m - 1) // m) * m


def _encoder_kernel(x_ref, w1_ref, b1_ref, w2_ref, b2_ref,
                    w3_ref, b3_ref, w4_ref, b4_ref, o_ref, *, lane_chunk):
    # x_ref: (batch_tile, 144), weights: (out, in), biases: (out, 1),
    # o_ref: (batch_tile, 8).
    n_chunks = x_ref.shape[0] // lane_chunk

    # Hoist the (tiny) weight/bias loads out of the chunk loop.
    w1 = w1_ref[...]
    b1 = b1_ref[...]
    w2 = w2_ref[...]
    b2 = b2_ref[...]
    w3 = w3_ref[...]
    b3 = b3_ref[...]
    w4 = w4_ref[...]
    b4 = b4_ref[...]

    def body(c, carry):
        start = pl.multiple_of(c * lane_chunk, lane_chunk)
        x_c = x_ref[pl.ds(start, lane_chunk), :]                  # (chunk, 144)
        # Layer 1: contract the shared 144 axis -> (64, chunk); batch on lanes.
        h = lax.dot_general(w1, x_c,
                            dimension_numbers=(((1,), (1,)), ((), ())),
                            preferred_element_type=jnp.float32)
        h = jnp.maximum(h + b1, 0.0)
        h = jnp.maximum(
            jnp.dot(w2, h, preferred_element_type=jnp.float32) + b2, 0.0)
        h = jnp.maximum(
            jnp.dot(w3, h, preferred_element_type=jnp.float32) + b3, 0.0)
        h = jnp.maximum(
            jnp.dot(w4, h, preferred_element_type=jnp.float32) + b4, 0.0)
        # (8, chunk) -> (chunk, 8): tiny in-kernel transpose, stored directly.
        o_ref[pl.ds(start, lane_chunk), :] = h.T.astype(o_ref.dtype)
        return carry

    lax.fori_loop(0, n_chunks, body, None, unroll=True)


def linear_encoder120(x, params, *, batch_tile=None, lane_chunk=None):
    """x: (B, 144) float32.  params: w1..w4 as (out, in), b1..b4 as (out, 1).

    Returns (B, 8), matching PyTorch's ReLU-terminated encoder.
    """
    B, D_in = x.shape
    assert D_in == IN_DIM, f"expected input dim {IN_DIM}, got {D_in}"

    B_pad128 = _round_up(max(B, 1), 128)
    if batch_tile is None:
        # Large tile to amortize the ~0.35us/grid-step overhead, but keep at
        # least 2 grid steps when possible so v7x's two TensorCores both work.
        batch_tile = min(2048, _round_up(pl.cdiv(B_pad128, 2), 128))
    batch_tile = max(128, _round_up(batch_tile, 128))
    B_pad = _round_up(max(B, 1), batch_tile)

    if lane_chunk is None:
        lane_chunk = 256 if batch_tile % 256 == 0 else 128
    assert batch_tile % lane_chunk == 0

    # Pad only the remainder rows (no transpose, no full-array HBM rewrite).
    if B_pad != B:
        x = jnp.pad(x, ((0, B_pad - B), (0, 0)))

    w1, b1 = params["w1"], params["b1"]
    w2, b2 = params["w2"], params["b2"]
    w3, b3 = params["w3"], params["b3"]
    w4, b4 = params["w4"], params["b4"]

    grid = (B_pad // batch_tile,)

    def batch_map(i):
        return (i, 0)

    def const_map(i):
        return (0, 0)

    n_params = sum(d_in * d_out + d_out for d_in, d_out in zip(DIMS[:-1], DIMS[1:]))
    flops_per_row = 2 * sum(d_in * d_out for d_in, d_out in zip(DIMS[:-1], DIMS[1:]))
    cost = pl.CostEstimate(
        flops=flops_per_row * B_pad,
        transcendentals=0,
        bytes_accessed=(IN_DIM + DIMS[-1]) * 4 * B_pad + n_params * 4,
    )

    kernel = functools.partial(_encoder_kernel, lane_chunk=lane_chunk)

    out = pl.pallas_call(
        kernel,
        out_shape=jax.ShapeDtypeStruct((B_pad, DIMS[-1]), x.dtype),
        grid_spec=pltpu.PrefetchScalarGridSpec(
            num_scalar_prefetch=0,
            grid=grid,
            in_specs=[
                pl.BlockSpec((batch_tile, IN_DIM), batch_map),   # x tile, natural layout
                pl.BlockSpec((64, IN_DIM), const_map),           # w1
                pl.BlockSpec((64, 1), const_map),                # b1
                pl.BlockSpec((32, 64), const_map),               # w2
                pl.BlockSpec((32, 1), const_map),                # b2
                pl.BlockSpec((16, 32), const_map),               # w3
                pl.BlockSpec((16, 1), const_map),                # b3
                pl.BlockSpec((8, 16), const_map),                # w4
                pl.BlockSpec((8, 1), const_map),                 # b4
            ],
            out_specs=pl.BlockSpec((batch_tile, DIMS[-1]), batch_map),
        ),
        compiler_params=pltpu.CompilerParams(
            dimension_semantics=("parallel",),
            vmem_limit_bytes=32 * 1024 * 1024,
        ),
        cost_estimate=cost,
    )(x, w1, b1, w2, b2, w3, b3, w4, b4)

    # Padded rows contain relu(bias) garbage; slice them off here.
    return out[:B]


def init_params(key):
    """PyTorch-style init: Linear.weight (out, in), bias (out, 1), U(+/- 1/sqrt(fan_in))."""
    ks = jax.random.split(key, 2 * (len(DIMS) - 1))
    params = {}
    for idx, (d_in, d_out) in enumerate(zip(DIMS[:-1], DIMS[1:])):
        bound = 1.0 / jnp.sqrt(d_in)
        w = jax.random.uniform(ks[2 * idx], (d_out, d_in), jnp.float32, -bound, bound)
        b = jax.random.uniform(ks[2 * idx + 1], (d_out, 1), jnp.float32, -bound, bound)
        params[f"w{idx + 1}"] = w
        params[f"b{idx + 1}"] = b
    return params


def reference(x, p):
    h = x
    for i in range(1, 5):
        h = jnp.maximum(h @ p[f"w{i}"].T + p[f"b{i}"][:, 0], 0.0)
    return h


if __name__ == "__main__":
    key = jax.random.PRNGKey(0)
    kx, kp = jax.random.split(key)

    B = 8                                   # small demo batch; wrapper pads the tail
    x = jax.random.normal(kx, (B, IN_DIM), jnp.float32)
    params = init_params(kp)

    run = jax.jit(linear_encoder120)
    out = jax.block_until_ready(run(x, params))

    ref = reference(x, params)
    assert out.shape == (B, 8), out.shape
    assert jnp.allclose(out, ref, atol=1e-5, rtol=1e-5), "mismatch vs reference"

    print("KERNEL_OK")
</pallas_src>

<mosaic_0001>
module attributes {stable_mosaic.version = 11 : i64} {
  func.func @_encoder_kernel(%arg0: i32, %arg1: memref<128x144xf32, #tpu.memory_space<vmem>>, %arg2: memref<64x144xf32, #tpu.memory_space<vmem>>, %arg3: memref<64x1xf32, #tpu.memory_space<vmem>>, %arg4: memref<32x64xf32, #tpu.memory_space<vmem>>, %arg5: memref<32x1xf32, #tpu.memory_space<vmem>>, %arg6: memref<16x32xf32, #tpu.memory_space<vmem>>, %arg7: memref<16x1xf32, #tpu.memory_space<vmem>>, %arg8: memref<8x16xf32, #tpu.memory_space<vmem>>, %arg9: memref<8x1xf32, #tpu.memory_space<vmem>>, %arg10: memref<128x8xf32, #tpu.memory_space<vmem>>) attributes {dimension_semantics = [#tpu.dimension_semantics<parallel>], iteration_bounds = array<i64: 1>, scalar_prefetch = 0 : i64, scratch_operands = 0 : i64, tpu.core_type = #tpu.core_type<tc>, window_params = [{transform_indices = @transform_0, window_bounds = array<i64: 128, 144>}, {pipeline_mode = #tpu.pipeline_mode<synchronous>, transform_indices = @transform_1, window_bounds = array<i64: 64, 144>}, {pipeline_mode = #tpu.pipeline_mode<synchronous>, transform_indices = @transform_2, window_bounds = array<i64: 64, 1>}, {pipeline_mode = #tpu.pipeline_mode<synchronous>, transform_indices = @transform_3, window_bounds = array<i64: 32, 64>}, {pipeline_mode = #tpu.pipeline_mode<synchronous>, transform_indices = @transform_4, window_bounds = array<i64: 32, 1>}, {pipeline_mode = #tpu.pipeline_mode<synchronous>, transform_indices = @transform_5, window_bounds = array<i64: 16, 32>}, {pipeline_mode = #tpu.pipeline_mode<synchronous>, transform_indices = @transform_6, window_bounds = array<i64: 16, 1>}, {pipeline_mode = #tpu.pipeline_mode<synchronous>, transform_indices = @transform_7, window_bounds = array<i64: 8, 16>}, {pipeline_mode = #tpu.pipeline_mode<synchronous>, transform_indices = @transform_8, window_bounds = array<i64: 8, 1>}, {transform_indices = @transform_9, window_bounds = array<i64: 128, 8>}]} {
    %c0 = arith.constant 0 : index
    %c0_0 = arith.constant 0 : index
    %0 = vector.load %arg2[%c0, %c0_0] : memref<64x144xf32, #tpu.memory_space<vmem>>, vector<64x144xf32>
    %c0_1 = arith.constant 0 : index
    %c0_2 = arith.constant 0 : index
    %1 = vector.load %arg3[%c0_1, %c0_2] : memref<64x1xf32, #tpu.memory_space<vmem>>, vector<64x1xf32>
    %c0_3 = arith.constant 0 : index
    %c0_4 = arith.constant 0 : index
    %2 = vector.load %arg4[%c0_3, %c0_4] : memref<32x64xf32, #tpu.memory_space<vmem>>, vector<32x64xf32>
    %c0_5 = arith.constant 0 : index
    %c0_6 = arith.constant 0 : index
    %3 = vector.load %arg5[%c0_5, %c0_6] : memref<32x1xf32, #tpu.memory_space<vmem>>, vector<32x1xf32>
    %c0_7 = arith.constant 0 : index
    %c0_8 = arith.constant 0 : index
    %4 = vector.load %arg6[%c0_7, %c0_8] : memref<16x32xf32, #tpu.memory_space<vmem>>, vector<16x32xf32>
    %c0_9 = arith.constant 0 : index
    %c0_10 = arith.constant 0 : index
    %5 = vector.load %arg7[%c0_9, %c0_10] : memref<16x1xf32, #tpu.memory_space<vmem>>, vector<16x1xf32>
    %c0_11 = arith.constant 0 : index
    %c0_12 = arith.constant 0 : index
    %6 = vector.load %arg8[%c0_11, %c0_12] : memref<8x16xf32, #tpu.memory_space<vmem>>, vector<8x16xf32>
    %c0_13 = arith.constant 0 : index
    %c0_14 = arith.constant 0 : index
    %7 = vector.load %arg9[%c0_13, %c0_14] : memref<8x1xf32, #tpu.memory_space<vmem>>, vector<8x1xf32>
    %c0_i32 = arith.constant 0 : i32
    %c128_i32 = arith.constant 128 : i32
    %8 = arith.muli %c0_i32, %c128_i32 : i32
    %9 = tpu.assume_multiple %8, 128 : i32
    %10 = arith.index_cast %9 : i32 to index
    %c0_15 = arith.constant 0 : index
    %11 = vector.load %arg1[%10, %c0_15] : memref<128x144xf32, #tpu.memory_space<vmem>>, vector<128x144xf32>
    %cst = arith.constant dense<0.000000e+00> : vector<64x128xf32>
    %12 = tpu.matmul %0, %11, %cst {dimension_numbers = #tpu.dot_dimension_numbers<[1], [1], [0], [0], [0, 0, 1, 0], [], []>} : vector<64x144xf32>, vector<128x144xf32>, vector<64x128xf32> -> vector<64x128xf32>
    %13 = vector.broadcast %1 : vector<64x1xf32> to vector<64x128xf32>
    %14 = arith.addf %12, %13 : vector<64x128xf32>
    %cst_16 = arith.constant 0.000000e+00 : f32
    %15 = vector.broadcast %cst_16 : f32 to vector<64x128xf32>
    %16 = arith.maximumf %14, %15 : vector<64x128xf32>
    %cst_17 = arith.constant dense<0.000000e+00> : vector<32x128xf32>
    %17 = tpu.matmul %2, %16, %cst_17 {dimension_numbers = #tpu.dot_dimension_numbers<[1], [0], [0], [1], [0, 0, 1, 1], [], []>} : vector<32x64xf32>, vector<64x128xf32>, vector<32x128xf32> -> vector<32x128xf32>
    %18 = vector.broadcast %3 : vector<32x1xf32> to vector<32x128xf32>
    %19 = arith.addf %17, %18 : vector<32x128xf32>
    %cst_18 = arith.constant 0.000000e+00 : f32
    %20 = vector.broadcast %cst_18 : f32 to vector<32x128xf32>
    %21 = arith.maximumf %19, %20 : vector<32x128xf32>
    %cst_19 = arith.constant dense<0.000000e+00> : vector<16x128xf32>
    %22 = tpu.matmul %4, %21, %cst_19 {dimension_numbers = #tpu.dot_dimension_numbers<[1], [0], [0], [1], [0, 0, 1, 1], [], []>} : vector<16x32xf32>, vector<32x128xf32>, vector<16x128xf32> -> vector<16x128xf32>
    %23 = vector.broadcast %5 : vector<16x1xf32> to vector<16x128xf32>
    %24 = arith.addf %22, %23 : vector<16x128xf32>
    %cst_20 = arith.constant 0.000000e+00 : f32
    %25 = vector.broadcast %cst_20 : f32 to vector<16x128xf32>
    %26 = arith.maximumf %24, %25 : vector<16x128xf32>
    %cst_21 = arith.constant dense<0.000000e+00> : vector<8x128xf32>
    %27 = tpu.matmul %6, %26, %cst_21 {dimension_numbers = #tpu.dot_dimension_numbers<[1], [0], [0], [1], [0, 0, 1, 1], [], []>} : vector<8x16xf32>, vector<16x128xf32>, vector<8x128xf32> -> vector<8x128xf32>
    %28 = vector.broadcast %7 : vector<8x1xf32> to vector<8x128xf32>
    %29 = arith.addf %27, %28 : vector<8x128xf32>
    %cst_22 = arith.constant 0.000000e+00 : f32
    %30 = vector.broadcast %cst_22 : f32 to vector<8x128xf32>
    %31 = arith.maximumf %29, %30 : vector<8x128xf32>
    %32 = tpu.transpose %31, [1, 0] : vector<8x128xf32> -> vector<128x8xf32>
    %33 = arith.index_cast %9 : i32 to index
    %c0_23 = arith.constant 0 : index
    %34 = vector.load %arg10[%33, %c0_23] : memref<128x8xf32, #tpu.memory_space<vmem>>, vector<128x8xf32>
    tpu.vector_store %arg10[%33, %c0_23], %32 {strides = array<i32>} : memref<128x8xf32, #tpu.memory_space<vmem>>, vector<128x8xf32>,
    %c1_i32 = arith.constant 1 : i32
    return
  }
  func.func @transform_0(%arg0: i32) -> (i32, i32) {
    %c0_i32 = arith.constant 0 : i32
    %c0_i32_0 = arith.constant 0 : i32
    return %arg0, %c0_i32 : i32, i32
  }
  func.func @transform_1(%arg0: i32) -> (i32, i32) {
    %c0_i32 = arith.constant 0 : i32
    %c0_i32_0 = arith.constant 0 : i32
    %c0_i32_1 = arith.constant 0 : i32
    return %c0_i32, %c0_i32_0 : i32, i32
  }
  func.func @transform_2(%arg0: i32) -> (i32, i32) {
    %c0_i32 = arith.constant 0 : i32
    %c0_i32_0 = arith.constant 0 : i32
    %c0_i32_1 = arith.constant 0 : i32
    return %c0_i32, %c0_i32_0 : i32, i32
  }
  func.func @transform_3(%arg0: i32) -> (i32, i32) {
    %c0_i32 = arith.constant 0 : i32
    %c0_i32_0 = arith.constant 0 : i32
    %c0_i32_1 = arith.constant 0 : i32
    return %c0_i32, %c0_i32_0 : i32, i32
  }
  func.func @transform_4(%arg0: i32) -> (i32, i32) {
    %c0_i32 = arith.constant 0 : i32
    %c0_i32_0 = arith.constant 0 : i32
    %c0_i32_1 = arith.constant 0 : i32
    return %c0_i32, %c0_i32_0 : i32, i32
  }
  func.func @transform_5(%arg0: i32) -> (i32, i32) {
    %c0_i32 = arith.constant 0 : i32
    %c0_i32_0 = arith.constant 0 : i32
    %c0_i32_1 = arith.constant 0 : i32
    return %c0_i32, %c0_i32_0 : i32, i32
  }
  func.func @transform_6(%arg0: i32) -> (i32, i32) {
    %c0_i32 = arith.constant 0 : i32
    %c0_i32_0 = arith.constant 0 : i32
    %c0_i32_1 = arith.constant 0 : i32
    return %c0_i32, %c0_i32_0 : i32, i32
  }
  func.func @transform_7(%arg0: i32) -> (i32, i32) {
    %c0_i32 = arith.constant 0 : i32
    %c0_i32_0 = arith.constant 0 : i32
    %c0_i32_1 = arith.constant 0 : i32
    return %c0_i32, %c0_i32_0 : i32, i32
  }
  func.func @transform_8(%arg0: i32) -> (i32, i32) {
    %c0_i32 = arith.constant 0 : i32
    %c0_i32_0 = arith.constant 0 : i32
    %c0_i32_1 = arith.constant 0 : i32
    return %c0_i32, %c0_i32_0 : i32, i32
  }
  func.func @transform_9(%arg0: i32) -> (i32, i32) {
    %c0_i32 = arith.constant 0 : i32
    %c0_i32_0 = arith.constant 0 : i32
    return %arg0, %c0_i32 : i32, i32
  }
}

</mosaic_0001>

<llo_original>
// kernel: linear_encoder120.1
$region0: #{linear_encoder120.1}
  #allocation0 [shape = 'u32[]', space=smem, size = 0x4, offset = 0x4, fixed_abs, tag = 'smem constant byte address 0x4 - core index']
  #allocation1 [shape = 'u32[144,128]{1,0:T(1,128)}', space=vmem, size = 0x12000, scoped, tag = 'internal scratch']
  %s0 = inlined_call_operand.vmem [shape: f32[128,144], index: 0, kind: input, shape index: {}]
  %s1 = inlined_call_operand.vmem [shape: f32[64,144], index: 1, kind: input, shape index: {}]
  %s2 = inlined_call_operand.vmem [shape: f32[64,1], index: 2, kind: input, shape index: {}]
  %s3 = inlined_call_operand.vmem [shape: f32[32,64], index: 3, kind: input, shape index: {}]
  %s4 = inlined_call_operand.vmem [shape: f32[32,1], index: 4, kind: input, shape index: {}]
  %s5 = inlined_call_operand.vmem [shape: f32[16,32], index: 5, kind: input, shape index: {}]
  %s6 = inlined_call_operand.vmem [shape: f32[16,1], index: 6, kind: input, shape index: {}]
  %s7 = inlined_call_operand.vmem [shape: f32[8,16], index: 7, kind: input, shape index: {}]
  %s8 = inlined_call_operand.vmem [shape: f32[8,1], index: 8, kind: input, shape index: {}]
  %s9 = inlined_call_operand.vmem [shape: f32[128,8], index: 9, kind: output, shape index: {}]
  %s10 = sld [smem:[#allocation0]]
  $region46: #{linear_encoder120.1} parent=0
    _
  %s12 = ssub.s32 1, %s10
  %s13 = scalar_select 0, %s12, %s10
  // Predicated region
  $region2: #{linear_encoder120.1} parent=0 // pred_check
    _
  $region3: #{linear_encoder120.1} parent=0 // pred_check_branch
    %15 = sbr.rel (0) target = $region5
  $region4: #{linear_encoder120.1} parent=0 // pred_region
    _
  $region5: #{linear_encoder120.1} parent=0 // pred_fallthru
    _
  // Predicated region
  $region6: #{linear_encoder120.1} parent=0 // pred_check
    _
  $region7: #{linear_encoder120.1} parent=0 // pred_check_branch
    %17 = sbr.rel (0) target = $region9
  $region8: #{linear_encoder120.1} parent=0 // pred_region
    _
  $region9: #{linear_encoder120.1} parent=0 // pred_fallthru
    _
  // Predicated region
  $region10: #{linear_encoder120.1} parent=0 // pred_check
    _
  $region11: #{linear_encoder120.1} parent=0 // pred_check_branch
    %19 = sbr.rel (0) target = $region13
  $region12: #{linear_encoder120.1} parent=0 // pred_region
    _
  $region13: #{linear_encoder120.1} parent=0 // pred_fallthru
    _
  // Predicated region
  $region14: #{linear_encoder120.1} parent=0 // pred_check
    _
  $region15: #{linear_encoder120.1} parent=0 // pred_check_branch
    %21 = sbr.rel (0) target = $region17
  $region16: #{linear_encoder120.1} parent=0 // pred_region
    _
  $region17: #{linear_encoder120.1} parent=0 // pred_fallthru
    _
  // Predicated region
  $region18: #{linear_encoder120.1} parent=0 // pred_check
    _
  $region19: #{linear_encoder120.1} parent=0 // pred_check_branch
    %23 = sbr.rel (0) target = $region21
  $region20: #{linear_encoder120.1} parent=0 // pred_region
    _
  $region21: #{linear_encoder120.1} parent=0 // pred_fallthru
    _
  // Predicated region
  $region22: #{linear_encoder120.1} parent=0 // pred_check
    _
  $region23: #{linear_encoder120.1} parent=0 // pred_check_branch
    %25 = sbr.rel (0) target = $region25
  $region24: #{linear_encoder120.1} parent=0 // pred_region
    _
  $region25: #{linear_encoder120.1} parent=0 // pred_fallthru
    _
  // Predicated region
  $region26: #{linear_encoder120.1} parent=0 // pred_check
    _
  $region27: #{linear_encoder120.1} parent=0 // pred_check_branch
    %27 = sbr.rel (0) target = $region29
  $region28: #{linear_encoder120.1} parent=0 // pred_region
    _
  $region29: #{linear_encoder120.1} parent=0 // pred_fallthru
    _
  // Predicated region
  $region30: #{linear_encoder120.1} parent=0 // pred_check
    _
  $region31: #{linear_encoder120.1} parent=0 // pred_check_branch
    %29 = sbr.rel (0) target = $region33
  $region32: #{linear_encoder120.1} parent=0 // pred_region
    _
  $region33: #{linear_encoder120.1} parent=0 // pred_fallthru
    _
  // Predicated region
  $region34: #{linear_encoder120.1} parent=0 // pred_check
    _
  $region35: #{linear_encoder120.1} parent=0 // pred_check_branch
    %31 = sbr.rel (0) target = $region37
  $region36: #{linear_encoder120.1} parent=0 // pred_region
    _
  $region37: #{linear_encoder120.1} parent=0 // pred_fallthru
    _
  %v32 = vld [vmem:[%s1] sm:$0xff]
  %v33 = vld [vmem:[%s1 + $0x8] sm:$0xff]
  %v34 = vld [vmem:[%s1 + $0x10] sm:$0xff]
  %v35 = vld [vmem:[%s1 + $0x18] sm:$0xff]
  %v36 = vld [vmem:[%s1 + $0x20] sm:$0xff]
  %v37 = vld [vmem:[%s1 + $0x28] sm:$0xff]
  %v38 = vld [vmem:[%s1 + $0x30] sm:$0xff]
  %v39 = vld [vmem:[%s1 + $0x38] sm:$0xff]
  %v40 = vld [vmem:[%s1 + $0x40] sm:$0xff]
  %v41 = vld [vmem:[%s1 + $0x48] sm:$0xff]
  %v42 = vld [vmem:[%s1 + $0x50] sm:$0xff]
  %v43 = vld [vmem:[%s1 + $0x58] sm:$0xff]
  %v44 = vld [vmem:[%s1 + $0x60] sm:$0xff]
  %v45 = vld [vmem:[%s1 + $0x68] sm:$0xff]
  %v46 = vld [vmem:[%s1 + $0x70] sm:$0xff]
  %v47 = vld [vmem:[%s1 + $0x78] sm:$0xff]
  %v48 = vld [vmem:[%s2] sm:$0xff]
  %v49 = vld [vmem:[%s2 + $0x8] sm:$0xff]
  %v50 = vld [vmem:[%s2 + $0x10] sm:$0xff]
  %v51 = vld [vmem:[%s2 + $0x18] sm:$0xff]
  %v52 = vld [vmem:[%s2 + $0x20] sm:$0xff]
  %v53 = vld [vmem:[%s2 + $0x28] sm:$0xff]
  %v54 = vld [vmem:[%s2 + $0x30] sm:$0xff]
  %v55 = vld [vmem:[%s2 + $0x38] sm:$0xff]
  %v56 = vld [vmem:[%s3] sm:$0xff]
  %v57 = vld [vmem:[%s3 + $0x8] sm:$0xff]
  %v58 = vld [vmem:[%s3 + $0x10] sm:$0xff]
  %v59 = vld [vmem:[%s3 + $0x18] sm:$0xff]
  %v60 = vld [vmem:[%s4] sm:$0xff]
  %v61 = vld [vmem:[%s4 + $0x8] sm:$0xff]
  %v62 = vld [vmem:[%s4 + $0x10] sm:$0xff]
  %v63 = vld [vmem:[%s4 + $0x18] sm:$0xff]
  %v64 = vld [vmem:[%s5] sm:$0xff]
  %v65 = vld [vmem:[%s5 + $0x8] sm:$0xff]
  %v66 = vld [vmem:[%s6] sm:$0xff]
  %v67 = vld [vmem:[%s6 + $0x8] sm:$0xff]
  %v68 = vld [vmem:[%s7] sm:$0xff]
  %v69 = vld [vmem:[%s8] sm:$0xff]
  %s70 = smul.u32 0, 2
  %s71 = smul.addr %s70, 8
  %s72 = scalar_lea.vmem %s0, %s71
  %v73 = vld [vmem:[%s72] sm:$0xff]
  %v74 = vld [vmem:[%s72 + $0x8] sm:$0xff]
  %v75 = vld [vmem:[%s72 + $0x10] sm:$0xff]
  %v76 = vld [vmem:[%s72 + $0x18] sm:$0xff]
  %v77 = vld [vmem:[%s72 + $0x20] sm:$0xff]
  %v78 = vld [vmem:[%s72 + $0x28] sm:$0xff]
  %v79 = vld [vmem:[%s72 + $0x30] sm:$0xff]
  %v80 = vld [vmem:[%s72 + $0x38] sm:$0xff]
  %v81 = vld [vmem:[%s72 + $0x40] sm:$0xff]
  %v82 = vld [vmem:[%s72 + $0x48] sm:$0xff]
  %v83 = vld [vmem:[%s72 + $0x50] sm:$0xff]
  %v84 = vld [vmem:[%s72 + $0x58] sm:$0xff]
  %v85 = vld [vmem:[%s72 + $0x60] sm:$0xff]
  %v86 = vld [vmem:[%s72 + $0x68] sm:$0xff]
  %v87 = vld [vmem:[%s72 + $0x70] sm:$0xff]
  %v88 = vld [vmem:[%s72 + $0x78] sm:$0xff]
  %v89 = vld [vmem:[%s72 + $0x80] sm:$0xff]
  %v90 = vld [vmem:[%s72 + $0x88] sm:$0xff]
  %v91 = vld [vmem:[%s72 + $0x90] sm:$0xff]
  %v92 = vld [vmem:[%s72 + $0x98] sm:$0xff]
  %v93 = vld [vmem:[%s72 + $0xa0] sm:$0xff]
  %v94 = vld [vmem:[%s72 + $0xa8] sm:$0xff]
  %v95 = vld [vmem:[%s72 + $0xb0] sm:$0xff]
  %v96 = vld [vmem:[%s72 + $0xb8] sm:$0xff]
  %v97 = vld [vmem:[%s72 + $0xc0] sm:$0xff]
  %v98 = vld [vmem:[%s72 + $0xc8] sm:$0xff]
  %v99 = vld [vmem:[%s72 + $0xd0] sm:$0xff]
  %v100 = vld [vmem:[%s72 + $0xd8] sm:$0xff]
  %v101 = vld [vmem:[%s72 + $0xe0] sm:$0xff]
  %v102 = vld [vmem:[%s72 + $0xe8] sm:$0xff]
  %v103 = vld [vmem:[%s72 + $0xf0] sm:$0xff]
  %v104 = vld [vmem:[%s72 + $0xf8] sm:$0xff]
  %106 = vset.pattern.permute.xlu0 0
  %107 = vperm.xlu0 %106, %v48
  %v108 = vpop.permute.xlu0 %107
  %111 = vset.pattern.permute.xlu0 0
  %112 = vperm.xlu0 %111, %v49
  %v113 = vpop.permute.xlu0 %112
  %116 = vset.pattern.permute.xlu0 0
  %117 = vperm.xlu0 %116, %v50
  %v118 = vpop.permute.xlu0 %117
  %121 = vset.pattern.permute.xlu0 0
  %122 = vperm.xlu0 %121, %v51
  %v123 = vpop.permute.xlu0 %122
  %126 = vset.pattern.permute.xlu0 0
  %127 = vperm.xlu0 %126, %v52
  %v128 = vpop.permute.xlu0 %127
  %131 = vset.pattern.permute.xlu0 0
  %132 = vperm.xlu0 %131, %v53
  %v133 = vpop.permute.xlu0 %132
  %136 = vset.pattern.permute.xlu0 0
  %137 = vperm.xlu0 %136, %v54
  %v138 = vpop.permute.xlu0 %137
  %141 = vset.pattern.permute.xlu0 0
  %142 = vperm.xlu0 %141, %v55
  %v143 = vpop.permute.xlu0 %142
  %vm145 = vcmask 130048
  %v147 = vsel %vm145, %v33, 0
  %v150 = vsel %vm145, %v35, 0
  %v153 = vsel %vm145, %v37, 0
  %v156 = vsel %vm145, %v39, 0
  %v159 = vsel %vm145, %v41, 0
  %v162 = vsel %vm145, %v43, 0
  %v165 = vsel %vm145, %v45, 0
  %v168 = vsel %vm145, %v47, 0
  %v171 = vsel %vm145, %v74, 0
  %v174 = vsel %vm145, %v76, 0
  %v177 = vsel %vm145, %v78, 0
  %v180 = vsel %vm145, %v80, 0
  %v183 = vsel %vm145, %v82, 0
  %v186 = vsel %vm145, %v84, 0
  %v189 = vsel %vm145, %v86, 0
  %v192 = vsel %vm145, %v88, 0
  %v195 = vsel %vm145, %v90, 0
  %v198 = vsel %vm145, %v92, 0
  %v201 = vsel %vm145, %v94, 0
  %v204 = vsel %vm145, %v96, 0
  %v207 = vsel %vm145, %v98, 0
  %v210 = vsel %vm145, %v100, 0
  %v213 = vsel %vm145, %v102, 0
  %v216 = vsel %vm145, %v104, 0
  %218 = vmatprep.subr.mxu0 %v216
  %219 = vmatpush1.xpose.msra.mxu0 %v103
  %220 = vmatprep.subr.mxu0 %v213
  %221 = vmatpush1.xpose.msra.mxu0 %v101
  %222 = vmatprep.subr.mxu0 %v210
  %223 = vmatpush1.xpose.msra.mxu0 %v99
  %224 = vmatprep.subr.mxu0 %v207
  %225 = vmatpush1.xpose.msra.mxu0 %v97
  %226 = vmatprep.subr.mxu0 %v204
  %227 = vmatpush1.xpose.msra.mxu0 %v95
  %228 = vmatprep.subr.mxu0 %v201
  %229 = vmatpush1.xpose.msra.mxu0 %v93
  %230 = vmatprep.subr.mxu0 %v198
  %231 = vmatpush1.xpose.msra.mxu0 %v91
  %232 = vmatprep.subr.mxu0 %v195
  %233 = vmatpush1.xpose.msra.mxu0 %v89
  %234 = vmatprep.subr.mxu0 %v192
  %235 = vmatpush1.xpose.msra.mxu0 %v87
  %236 = vmatprep.subr.mxu0 %v189
  %237 = vmatpush1.xpose.msra.mxu0 %v85
  %238 = vmatprep.subr.mxu0 %v186
  %239 = vmatpush1.xpose.msra.mxu0 %v83
  %240 = vmatprep.subr.mxu0 %v183
  %241 = vmatpush1.xpose.msra.mxu0 %v81
  %242 = vmatprep.subr.mxu0 %v180
  %243 = vmatpush1.xpose.msra.mxu0 %v79
  %244 = vmatprep.subr.mxu0 %v177
  %245 = vmatpush1.xpose.msra.mxu0 %v77
  %246 = vmatprep.subr.mxu0 %v174
  %247 = vmatpush1.xpose.msra.mxu0 %v75
  %248 = vmatprep.subr.mxu0 %v171
  %249 = vmatpush1.xpose.msra.mxu0 %v73
  %250 = vmatprep.subr.mxu0 0.0
  %251 = vmatpush2.xpose.msra.mxu0 0.0
  %252 = vmatprep.subr.mxu0 0.0
  %253 = vmatpush2.xpose.msra.mxu0 0.0
  %254 = vmatprep.subr.mxu0 0.0
  %255 = vmatpush2.xpose.msra.mxu0 0.0
  %256 = vmatprep.subr.mxu0 0.0
  %257 = vmatpush2.xpose.msra.mxu0 0.0
  %258 = vmatprep.subr.mxu0 0.0
  %259 = vmatpush2.xpose.msra.mxu0 0.0
  %260 = vmatprep.subr.mxu0 0.0
  %261 = vmatpush2.xpose.msra.mxu0 0.0
  %262 = vmatprep.subr.mxu0 0.0
  %263 = vmatpush2.xpose.msra.mxu0 0.0
  %264 = vmatprep.subr.mxu0 0.0
  %265 = vmatpush2.xpose.msra.mxu0 0.0
  %266 = vmatprep.subr.mxu0 0.0
  %267 = vmatpush2.xpose.msra.mxu0 0.0
  %268 = vmatprep.subr.mxu0 0.0
  %269 = vmatpush2.xpose.msra.mxu0 0.0
  %270 = vmatprep.subr.mxu0 0.0
  %271 = vmatpush2.xpose.msra.mxu0 0.0
  %272 = vmatprep.subr.mxu0 0.0
  %273 = vmatpush2.xpose.msra.mxu0 0.0
  %274 = vmatprep.subr.mxu0 0.0
  %275 = vmatpush2.xpose.msra.mxu0 0.0
  %276 = vmatprep.subr.mxu0 0.0
  %277 = vmatpush2.xpose.msra.mxu0 0.0
  %278 = vmatprep.subr.mxu0 0.0
  %279 = vmatpush2.xpose.msra.mxu0 0.0
  %280 = vmatprep.subr.mxu0 0.0
  %281 = vmatpush2.xpose.msra.mxu0 0.0
  %282 = vmatprep.mubr.f32.mxu0 %v147
  %283 = vmatmul.mubr.f32.gmra.mxu0 %v32
  %v284 = vpop.f32.mrf.mxu0
  %v285 = vadd.f32 %v108, %v284
  %v286 = vpop.f32.mrf.mxu0
  %287 = vmatprep.mubr.f32.mxu0 %v150
  %288 = vmatmul.mubr.f32.gmra.mxu0 %v34
  %v289 = vpop.f32.mrf.mxu0
  %v290 = vadd.f32 %v113, %v289
  %v291 = vpop.f32.mrf.mxu0
  %292 = vmatprep.mubr.f32.mxu0 %v153
  %293 = vmatmul.mubr.f32.gmra.mxu0 %v36
  %v294 = vpop.f32.mrf.mxu0
  %v295 = vadd.f32 %v118, %v294
  %v296 = vpop.f32.mrf.mxu0
  %297 = vmatprep.mubr.f32.mxu0 %v156
  %298 = vmatmul.mubr.f32.gmra.mxu0 %v38
  %v299 = vpop.f32.mrf.mxu0
  %v300 = vadd.f32 %v123, %v299
  %v301 = vpop.f32.mrf.mxu0
  %302 = vmatprep.mubr.f32.mxu0 %v159
  %303 = vmatmul.mubr.f32.gmra.mxu0 %v40
  %v304 = vpop.f32.mrf.mxu0
  %v305 = vadd.f32 %v128, %v304
  %v306 = vpop.f32.mrf.mxu0
  %307 = vmatprep.mubr.f32.mxu0 %v162
  %308 = vmatmul.mubr.f32.gmra.mxu0 %v42
  %v309 = vpop.f32.mrf.mxu0
  %v310 = vadd.f32 %v133, %v309
  %v311 = vpop.f32.mrf.mxu0
  %312 = vmatprep.mubr.f32.mxu0 %v165
  %313 = vmatmul.mubr.f32.gmra.mxu0 %v44
  %v314 = vpop.f32.mrf.mxu0
  %v315 = vadd.f32 %v138, %v314
  %v316 = vpop.f32.mrf.mxu0
  %317 = vmatprep.mubr.f32.mxu0 %v168
  %318 = vmatmul.mubr.f32.gmra.mxu0 %v46
  %v319 = vpop.f32.mrf.mxu0
  %v320 = vadd.f32 %v143, %v319
  %v321 = vpop.f32.mrf.mxu0
  %322 = vdwg.mxu0
  %v323 = vmax.f32 %v285, 0.0
  %v324 = vmax.f32 %v290, 0.0
  %v325 = vmax.f32 %v295, 0.0
  %v326 = vmax.f32 %v300, 0.0
  %v327 = vmax.f32 %v305, 0.0
  %v328 = vmax.f32 %v310, 0.0
  %v329 = vmax.f32 %v315, 0.0
  %v330 = vmax.f32 %v320, 0.0
  %332 = vset.pattern.permute.xlu0 0
  %333 = vperm.xlu0 %332, %v60
  %v334 = vpop.permute.xlu0 %333
  %337 = vset.pattern.permute.xlu0 0
  %338 = vperm.xlu0 %337, %v61
  %v339 = vpop.permute.xlu0 %338
  %342 = vset.pattern.permute.xlu0 0
  %343 = vperm.xlu0 %342, %v62
  %v344 = vpop.permute.xlu0 %343
  %347 = vset.pattern.permute.xlu0 0
  %348 = vperm.xlu0 %347, %v63
  %v349 = vpop.permute.xlu0 %348
  %vm351 = vcmask 523264
  %v353 = vsel %vm351, %v56, 0
  %v356 = vsel %vm351, %v57, 0
  %v359 = vsel %vm351, %v58, 0
  %v362 = vsel %vm351, %v59, 0
  %364 = vmatprep.subr.mxu0 0.0
  %365 = vmatpush1.msra.mxu0 0.0
  %366 = vmatprep.subr.mxu0 0.0
  %367 = vmatpush1.msra.mxu0 0.0
  %368 = vmatprep.subr.mxu0 0.0
  %369 = vmatpush1.msra.mxu0 0.0
  %370 = vmatprep.subr.mxu0 0.0
  %371 = vmatpush1.msra.mxu0 0.0
  %372 = vmatprep.subr.mxu0 0.0
  %373 = vmatpush1.msra.mxu0 0.0
  %374 = vmatprep.subr.mxu0 0.0
  %375 = vmatpush1.msra.mxu0 0.0
  %376 = vmatprep.subr.mxu0 0.0
  %377 = vmatpush1.msra.mxu0 0.0
  %378 = vmatprep.subr.mxu0 0.0
  %379 = vmatpush1.msra.mxu0 0.0
  %380 = vmatprep.subr.mxu0 0.0
  %381 = vmatpush1.msra.mxu0 %v330
  %382 = vmatprep.subr.mxu0 0.0
  %383 = vmatpush1.msra.mxu0 %v329
  %384 = vmatprep.subr.mxu0 0.0
  %385 = vmatpush1.msra.mxu0 %v328
  %386 = vmatprep.subr.mxu0 0.0
  %387 = vmatpush1.msra.mxu0 %v327
  %388 = vmatprep.subr.mxu0 0.0
  %389 = vmatpush1.msra.mxu0 %v326
  %390 = vmatprep.subr.mxu0 0.0
  %391 = vmatpush1.msra.mxu0 %v325
  %392 = vmatprep.subr.mxu0 0.0
  %393 = vmatpush1.msra.mxu0 %v324
  %394 = vmatprep.subr.mxu0 0.0
  %395 = vmatpush1.msra.mxu0 %v323
  %396 = vmatprep.subr.mxu0 0.0
  %397 = vmatpush2.msra.mxu0 0.0
  %398 = vmatprep.subr.mxu0 0.0
  %399 = vmatpush2.msra.mxu0 0.0
  %400 = vmatprep.subr.mxu0 0.0
  %401 = vmatpush2.msra.mxu0 0.0
  %402 = vmatprep.subr.mxu0 0.0
  %403 = vmatpush2.msra.mxu0 0.0
  %404 = vmatprep.subr.mxu0 0.0
  %405 = vmatpush2.msra.mxu0 0.0
  %406 = vmatprep.subr.mxu0 0.0
  %407 = vmatpush2.msra.mxu0 0.0
  %408 = vmatprep.subr.mxu0 0.0
  %409 = vmatpush2.msra.mxu0 0.0
  %410 = vmatprep.subr.mxu0 0.0
  %411 = vmatpush2.msra.mxu0 0.0
  %412 = vmatprep.subr.mxu0 0.0
  %413 = vmatpush2.msra.mxu0 0.0
  %414 = vmatprep.subr.mxu0 0.0
  %415 = vmatpush2.msra.mxu0 0.0
  %416 = vmatprep.subr.mxu0 0.0
  %417 = vmatpush2.msra.mxu0 0.0
  %418 = vmatprep.subr.mxu0 0.0
  %419 = vmatpush2.msra.mxu0 0.0
  %420 = vmatprep.subr.mxu0 0.0
  %421 = vmatpush2.msra.mxu0 0.0
  %422 = vmatprep.subr.mxu0 0.0
  %423 = vmatpush2.msra.mxu0 0.0
  %424 = vmatprep.subr.mxu0 0.0
  %425 = vmatpush2.msra.mxu0 0.0
  %426 = vmatprep.subr.mxu0 0.0
  %427 = vmatpush2.msra.mxu0 0.0
  %428 = vmatprep.mubr.f32.mxu0 0.0
  %429 = vmatmul.mubr.f32.gmra.mxu0 %v353
  %v430 = vpop.f32.mrf.mxu0
  %v431 = vadd.f32 %v334, %v430
  %v432 = vpop.f32.mrf.mxu0
  %433 = vmatprep.mubr.f32.mxu0 0.0
  %434 = vmatmul.mubr.f32.gmra.mxu0 %v356
  %v435 = vpop.f32.mrf.mxu0
  %v436 = vadd.f32 %v339, %v435
  %v437 = vpop.f32.mrf.mxu0
  %438 = vmatprep.mubr.f32.mxu0 0.0
  %439 = vmatmul.mubr.f32.gmra.mxu0 %v359
  %v440 = vpop.f32.mrf.mxu0
  %v441 = vadd.f32 %v344, %v440
  %v442 = vpop.f32.mrf.mxu0
  %443 = vmatprep.mubr.f32.mxu0 0.0
  %444 = vmatmul.mubr.f32.gmra.mxu0 %v362
  %v445 = vpop.f32.mrf.mxu0
  %v446 = vadd.f32 %v349, %v445
  %v447 = vpop.f32.mrf.mxu0
  %448 = vdwg.mxu0
  %v449 = vmax.f32 %v431, 0.0
  %v450 = vmax.f32 %v436, 0.0
  %v451 = vmax.f32 %v441, 0.0
  %v452 = vmax.f32 %v446, 0.0
  %454 = vset.pattern.permute.xlu0 0
  %455 = vperm.xlu0 %454, %v66
  %v456 = vpop.permute.xlu0 %455
  %459 = vset.pattern.permute.xlu0 0
  %460 = vperm.xlu0 %459, %v67
  %v461 = vpop.permute.xlu0 %460
  %vm463 = vcmask 261120
  %v465 = vsel %vm463, %v64, 0
  %v468 = vsel %vm463, %v65, 0
  %470 = vmatprep.subr.mxu0 0.0
  %471 = vmatpush1.msra.mxu0 0.0
  %472 = vmatprep.subr.mxu0 0.0
  %473 = vmatpush1.msra.mxu0 0.0
  %474 = vmatprep.subr.mxu0 0.0
  %475 = vmatpush1.msra.mxu0 0.0
  %476 = vmatprep.subr.mxu0 0.0
  %477 = vmatpush1.msra.mxu0 0.0
  %478 = vmatprep.subr.mxu0 0.0
  %479 = vmatpush1.msra.mxu0 0.0
  %480 = vmatprep.subr.mxu0 0.0
  %481 = vmatpush1.msra.mxu0 0.0
  %482 = vmatprep.subr.mxu0 0.0
  %483 = vmatpush1.msra.mxu0 0.0
  %484 = vmatprep.subr.mxu0 0.0
  %485 = vmatpush1.msra.mxu0 0.0
  %486 = vmatprep.subr.mxu0 0.0
  %487 = vmatpush1.msra.mxu0 0.0
  %488 = vmatprep.subr.mxu0 0.0
  %489 = vmatpush1.msra.mxu0 0.0
  %490 = vmatprep.subr.mxu0 0.0
  %491 = vmatpush1.msra.mxu0 0.0
  %492 = vmatprep.subr.mxu0 0.0
  %493 = vmatpush1.msra.mxu0 0.0
  %494 = vmatprep.subr.mxu0 0.0
  %495 = vmatpush1.msra.mxu0 %v452
  %496 = vmatprep.subr.mxu0 0.0
  %497 = vmatpush1.msra.mxu0 %v451
  %498 = vmatprep.subr.mxu0 0.0
  %499 = vmatpush1.msra.mxu0 %v450
  %500 = vmatprep.subr.mxu0 0.0
  %501 = vmatpush1.msra.mxu0 %v449
  %502 = vmatprep.subr.mxu0 0.0
  %503 = vmatpush2.msra.mxu0 0.0
  %504 = vmatprep.subr.mxu0 0.0
  %505 = vmatpush2.msra.mxu0 0.0
  %506 = vmatprep.subr.mxu0 0.0
  %507 = vmatpush2.msra.mxu0 0.0
  %508 = vmatprep.subr.mxu0 0.0
  %509 = vmatpush2.msra.mxu0 0.0
  %510 = vmatprep.subr.mxu0 0.0
  %511 = vmatpush2.msra.mxu0 0.0
  %512 = vmatprep.subr.mxu0 0.0
  %513 = vmatpush2.msra.mxu0 0.0
  %514 = vmatprep.subr.mxu0 0.0
  %515 = vmatpush2.msra.mxu0 0.0
  %516 = vmatprep.subr.mxu0 0.0
  %517 = vmatpush2.msra.mxu0 0.0
  %518 = vmatprep.subr.mxu0 0.0
  %519 = vmatpush2.msra.mxu0 0.0
  %520 = vmatprep.subr.mxu0 0.0
  %521 = vmatpush2.msra.mxu0 0.0
  %522 = vmatprep.subr.mxu0 0.0
  %523 = vmatpush2.msra.mxu0 0.0
  %524 = vmatprep.subr.mxu0 0.0
  %525 = vmatpush2.msra.mxu0 0.0
  %526 = vmatprep.subr.mxu0 0.0
  %527 = vmatpush2.msra.mxu0 0.0
  %528 = vmatprep.subr.mxu0 0.0
  %529 = vmatpush2.msra.mxu0 0.0
  %530 = vmatprep.subr.mxu0 0.0
  %531 = vmatpush2.msra.mxu0 0.0
  %532 = vmatprep.subr.mxu0 0.0
  %533 = vmatpush2.msra.mxu0 0.0
  %534 = vmatprep.mubr.f32.mxu0 0.0
  %535 = vmatmul.mubr.f32.gmra.mxu0 %v465
  %v536 = vpop.f32.mrf.mxu0
  %v537 = vadd.f32 %v456, %v536
  %v538 = vpop.f32.mrf.mxu0
  %539 = vmatprep.mubr.f32.mxu0 0.0
  %540 = vmatmul.mubr.f32.gmra.mxu0 %v468
  %v541 = vpop.f32.mrf.mxu0
  %v542 = vadd.f32 %v461, %v541
  %v543 = vpop.f32.mrf.mxu0
  %544 = vdwg.mxu0
  %v545 = vmax.f32 %v537, 0.0
  %v546 = vmax.f32 %v542, 0.0
  %548 = vset.pattern.permute.xlu0 0
  %549 = vperm.xlu0 %548, %v69
  %v550 = vpop.permute.xlu0 %549
  %v553 = vsel %vm145, %v68, 0
  %555 = vmatprep.subr.mxu0 0.0
  %556 = vmatpush1.msra.mxu0 0.0
  %557 = vmatprep.subr.mxu0 0.0
  %558 = vmatpush1.msra.mxu0 0.0
  %559 = vmatprep.subr.mxu0 0.0
  %560 = vmatpush1.msra.mxu0 0.0
  %561 = vmatprep.subr.mxu0 0.0
  %562 = vmatpush1.msra.mxu0 0.0
  %563 = vmatprep.subr.mxu0 0.0
  %564 = vmatpush1.msra.mxu0 0.0
  %565 = vmatprep.subr.mxu0 0.0
  %566 = vmatpush1.msra.mxu0 0.0
  %567 = vmatprep.subr.mxu0 0.0
  %568 = vmatpush1.msra.mxu0 0.0
  %569 = vmatprep.subr.mxu0 0.0
  %570 = vmatpush1.msra.mxu0 0.0
  %571 = vmatprep.subr.mxu0 0.0
  %572 = vmatpush1.msra.mxu0 0.0
  %573 = vmatprep.subr.mxu0 0.0
  %574 = vmatpush1.msra.mxu0 0.0
  %575 = vmatprep.subr.mxu0 0.0
  %576 = vmatpush1.msra.mxu0 0.0
  %577 = vmatprep.subr.mxu0 0.0
  %578 = vmatpush1.msra.mxu0 0.0
  %579 = vmatprep.subr.mxu0 0.0
  %580 = vmatpush1.msra.mxu0 0.0
  %581 = vmatprep.subr.mxu0 0.0
  %582 = vmatpush1.msra.mxu0 0.0
  %583 = vmatprep.subr.mxu0 0.0
  %584 = vmatpush1.msra.mxu0 %v546
  %585 = vmatprep.subr.mxu0 0.0
  %586 = vmatpush1.msra.mxu0 %v545
  %587 = vmatprep.subr.mxu0 0.0
  %588 = vmatpush2.msra.mxu0 0.0
  %589 = vmatprep.subr.mxu0 0.0
  %590 = vmatpush2.msra.mxu0 0.0
  %591 = vmatprep.subr.mxu0 0.0
  %592 = vmatpush2.msra.mxu0 0.0
  %593 = vmatprep.subr.mxu0 0.0
  %594 = vmatpush2.msra.mxu0 0.0
  %595 = vmatprep.subr.mxu0 0.0
  %596 = vmatpush2.msra.mxu0 0.0
  %597 = vmatprep.subr.mxu0 0.0
  %598 = vmatpush2.msra.mxu0 0.0
  %599 = vmatprep.subr.mxu0 0.0
  %600 = vmatpush2.msra.mxu0 0.0
  %601 = vmatprep.subr.mxu0 0.0
  %602 = vmatpush2.msra.mxu0 0.0
  %603 = vmatprep.subr.mxu0 0.0
  %604 = vmatpush2.msra.mxu0 0.0
  %605 = vmatprep.subr.mxu0 0.0
  %606 = vmatpush2.msra.mxu0 0.0
  %607 = vmatprep.subr.mxu0 0.0
  %608 = vmatpush2.msra.mxu0 0.0
  %609 = vmatprep.subr.mxu0 0.0
  %610 = vmatpush2.msra.mxu0 0.0
  %611 = vmatprep.subr.mxu0 0.0
  %612 = vmatpush2.msra.mxu0 0.0
  %613 = vmatprep.subr.mxu0 0.0
  %614 = vmatpush2.msra.mxu0 0.0
  %615 = vmatprep.subr.mxu0 0.0
  %616 = vmatpush2.msra.mxu0 0.0
  %617 = vmatprep.subr.mxu0 0.0
  %618 = vmatpush2.msra.mxu0 0.0
  %619 = vmatprep.mubr.f32.mxu0 0.0
  %620 = vmatmul.mubr.f32.gmra.mxu0 %v553
  %v621 = vpop.f32.mrf.mxu0
  %v622 = vadd.f32 %v550, %v621
  %v623 = vpop.f32.mrf.mxu0
  %624 = vdwg.mxu0
  %v625 = vmax.f32 %v622, 0.0
  %626 = vxpose.xlu0.b32.start [1/16] %v625, 128
  %627 = vxpose.xlu0.b32.cont [2/16] 0.0, 128
  %628 = vxpose.xlu0.b32.cont [3/16] 0.0, 128
  %629 = vxpose.xlu0.b32.cont [4/16] 0.0, 128
  %630 = vxpose.xlu0.b32.cont [5/16] 0.0, 128
  %631 = vxpose.xlu0.b32.cont [6/16] 0.0, 128
  %632 = vxpose.xlu0.b32.cont [7/16] 0.0, 128
  %633 = vxpose.xlu0.b32.cont [8/16] 0.0, 128
  %634 = vxpose.xlu0.b32.cont [9/16] 0.0, 128
  %635 = vxpose.xlu0.b32.cont [10/16] 0.0, 128
  %636 = vxpose.xlu0.b32.cont [11/16] 0.0, 128
  %637 = vxpose.xlu0.b32.cont [12/16] 0.0, 128
  %638 = vxpose.xlu0.b32.cont [13/16] 0.0, 128
  %639 = vxpose.xlu0.b32.cont [14/16] 0.0, 128
  %640 = vxpose.xlu0.b32.cont [15/16] 0.0, 128
  %641 = vxpose.xlu0.b32.end [16/16] 0.0, 128
  %v642 = vpop.trf.xlu0
  %v643 = vpop.trf.xlu0
  %v644 = vpop.trf.xlu0
  %v645 = vpop.trf.xlu0
  %v646 = vpop.trf.xlu0
  %v647 = vpop.trf.xlu0
  %v648 = vpop.trf.xlu0
  %v649 = vpop.trf.xlu0
  %v650 = vpop.trf.xlu0
  %v651 = vpop.trf.xlu0
  %v652 = vpop.trf.xlu0
  %v653 = vpop.trf.xlu0
  %v654 = vpop.trf.xlu0
  %v655 = vpop.trf.xlu0
  %v656 = vpop.trf.xlu0
  %v657 = vpop.trf.xlu0
  %vm658 = vcmask 64512
  %659 = vst.msk [vmem:[%s9] sm:$0xff] %vm658, %v642
  %660 = vst.msk [vmem:[%s9 + $0x8] sm:$0xff] %vm658, %v643
  %661 = vst.msk [vmem:[%s9 + $0x10] sm:$0xff] %vm658, %v644
  %662 = vst.msk [vmem:[%s9 + $0x18] sm:$0xff] %vm658, %v645
  %663 = vst.msk [vmem:[%s9 + $0x20] sm:$0xff] %vm658, %v646
  %664 = vst.msk [vmem:[%s9 + $0x28] sm:$0xff] %vm658, %v647
  %665 = vst.msk [vmem:[%s9 + $0x30] sm:$0xff] %vm658, %v648
  %666 = vst.msk [vmem:[%s9 + $0x38] sm:$0xff] %vm658, %v649
  %667 = vst.msk [vmem:[%s9 + $0x40] sm:$0xff] %vm658, %v650
  %668 = vst.msk [vmem:[%s9 + $0x48] sm:$0xff] %vm658, %v651
  %669 = vst.msk [vmem:[%s9 + $0x50] sm:$0xff] %vm658, %v652
  %670 = vst.msk [vmem:[%s9 + $0x58] sm:$0xff] %vm658, %v653
  %671 = vst.msk [vmem:[%s9 + $0x60] sm:$0xff] %vm658, %v654
  %672 = vst.msk [vmem:[%s9 + $0x68] sm:$0xff] %vm658, %v655
  %673 = vst.msk [vmem:[%s9 + $0x70] sm:$0xff] %vm658, %v656
  %674 = vst.msk [vmem:[%s9 + $0x78] sm:$0xff] %vm658, %v657
  // Predicated region
  $region38: #{linear_encoder120.1} parent=0 // pred_check
    _
  $region39: #{linear_encoder120.1} parent=0 // pred_check_branch
    %676 = sbr.rel (0) target = $region41
  $region40: #{linear_encoder120.1} parent=0 // pred_region
    _
  $region41: #{linear_encoder120.1} parent=0 // pred_fallthru
    _
  // Predicated region
  $region42: #{linear_encoder120.1} parent=0 // pred_check
    _
  $region43: #{linear_encoder120.1} parent=0 // pred_check_branch
    %678 = sbr.rel (0) target = $region45
  $region44: #{linear_encoder120.1} parent=0 // pred_region
    _
  $region45: #{linear_encoder120.1} parent=0 // pred_fallthru
    _

</llo_original>
